<compile_context>
chip_gen: v7x
topology: tpu7x:2x2x1
jax: 0.10.0
libtpu: 0.0.40
codegen_flags: <defaults>
</compile_context>

<pallas_src>
import functools

import jax
import jax.numpy as jnp
from jax.experimental import pallas as pl
from jax.experimental.pallas import tpu as pltpu

KH = KW = 3          # kernel_size
STRIDE = 1
PAD = 1
DILATION = 1         # TODO(synk): dilation != 1 not implemented (module default used)
BN_EPS = 1e-5
SUBLANE = 8


def _round_up(x, m):
    return ((x + m - 1) // m) * m


def _conv3x3_bn_relu(x, mask_ref, w_ref, shift_ref, W):
    """One folded ConvBlock on a channels-first, flat (batch*spatial) layout.

    x:         (Cin_pad, N) f32 value, N = Bt * H * W  (lane-dense)
    mask_ref:  Ref (8, N) f32 zero-padding validity masks (center tap omitted)
    w_ref:     Ref (Cout_pad, 9*Cin_pad) f32 -- BN scale folded, taps stacked on K
    shift_ref: Ref (Cout_pad, 1) f32         -- folded conv bias + BN shift
    """
    N = x.shape[1]
    taps = []
    m = 0
    for kh in range(KH):
        for kw in range(KW):
            dh, dw = kh - PAD, kw - PAD
            s = dh * W + dw
            # Shifted view of the flat image(s) via an XLU lane rotation
            # (roll semantics == jnp.roll: out[i] = x[(i - shift) % N], so
            # shift = -s gives out[p] = x[p + s]).  Out-of-image (padding)
            # positions -- including wrap-around across image boundaries when
            # batch is folded into lanes -- are zeroed by the mask.
            shifted = pltpu.roll(x, shift=(-s) % N, axis=1) if s else x
            if dh == 0 and dw == 0:
                taps.append(shifted)                       # center: mask all-true
            else:
                taps.append(shifted * mask_ref[pl.ds(m, 1), :])
                m += 1
    # Stack the 9 taps along the contraction axis: one K=9*Cin_pad matmul
    # replaces 9 skinny MXU pushes/pops + VPU accumulate-adds.
    stacked = jnp.concatenate(taps, axis=0)                # (9*Cin_pad, N)
    acc = jnp.dot(w_ref[...], stacked, preferred_element_type=jnp.float32)
    return jnp.maximum(acc + shift_ref[...], 0.0)


def dual_conv_kernel(x_ref, mask_ref, w1_ref, s1_ref, w2_ref, s2_ref, o_ref, *, W):
    """Fused ConvBlock -> ConvBlock for one step of Bt images.

    x_ref : (1, Cin_pad, N)     mask_ref: (8, N)
    w1_ref: (C_pad, 9*Cin_pad)  s1_ref:   (C_pad, 1)
    w2_ref: (C_pad, 9*C_pad)    s2_ref:   (C_pad, 1)
    o_ref : (1, C_pad, N)
    """
    x = x_ref[0].astype(jnp.float32)                             # (Cin_pad, N)
    y1 = _conv3x3_bn_relu(x, mask_ref, w1_ref, s1_ref, W)        # (C_pad, N)
    y2 = _conv3x3_bn_relu(y1, mask_ref, w2_ref, s2_ref, W)       # (C_pad, N)
    o_ref[0] = y2.astype(o_ref.dtype)


def _fold_block_params(w_oihw, bias, gamma, beta, mean, var, cin_pad, cout_pad,
                       eps=BN_EPS):
    """Fold eval-BN into conv weights; return tap-stacked weights + shift."""
    cout, cin = w_oihw.shape[0], w_oihw.shape[1]
    scale = gamma / jnp.sqrt(var + eps)                       # (Cout,)
    shift = (bias - mean) * scale + beta                      # (Cout,)
    # (Cout, Cin, KH, KW) -> (KH*KW, Cout, Cin), BN scale folded into weights.
    w_taps = jnp.transpose(w_oihw, (2, 3, 0, 1)).reshape(KH * KW, cout, cin)
    w_taps = w_taps * scale[None, :, None]
    # Zero-pad channels to sublane multiples so each tap is an 8-row tile.
    w_taps = jnp.pad(w_taps, ((0, 0), (0, cout_pad - cout), (0, cin_pad - cin)))
    # Stack taps along the contraction axis: (Cout_pad, KH*KW*Cin_pad).
    w_stacked = jnp.transpose(w_taps, (1, 0, 2)).reshape(cout_pad,
                                                         KH * KW * cin_pad)
    shift = jnp.pad(shift, (0, cout_pad - cout)).reshape(cout_pad, 1)
    return w_stacked.astype(jnp.float32), shift.astype(jnp.float32)


def _make_masks(H, W, bt):
    """(8, bt*H*W) f32 validity masks for the 8 non-center taps."""
    q = jnp.arange(H * W)
    hh, ww = q // W, q % W
    rows = []
    for kh in range(KH):
        for kw in range(KW):
            dh, dw = kh - PAD, kw - PAD
            if dh == 0 and dw == 0:
                continue
            rows.append((hh + dh >= 0) & (hh + dh < H)
                        & (ww + dw >= 0) & (ww + dw < W))
    m = jnp.stack(rows, axis=0).astype(jnp.float32)          # (8, HW)
    return jnp.tile(m, (1, bt))                              # (8, bt*HW)


def dual_conv_block(x_nchw, params, *, target_steps=2, bt_max=8):
    (w1, b1, g1, be1, m1, v1, w2, b2, g2, be2, m2, v2) = params
    B, Cin, H, W = x_nchw.shape
    C = w1.shape[0]          # out_channels (conv1 and conv2 share it)
    HW = H * W

    cin_pad = _round_up(Cin, SUBLANE)
    c_pad = _round_up(C, SUBLANE)

    # Batch folding: put Bt images side by side in the lane dim so the matmul
    # N dim grows past one MXU pass; keep >= target_steps grid iterations so
    # both v7x TensorCores get work (harmless extra tiny step on v5e/v6e).
    if B <= 1:
        steps, bt = 1, 1
    else:
        bt = min(bt_max, (B + target_steps - 1) // target_steps)
        steps = (B + bt - 1) // bt
    b_pad = steps * bt
    N = bt * HW

    w1s, sh1 = _fold_block_params(w1, b1, g1, be1, m1, v1, cin_pad, c_pad)
    w2s, sh2 = _fold_block_params(w2, b2, g2, be2, m2, v2, c_pad, c_pad)
    masks = _make_masks(H, W, bt)

    # NCHW -> channels padded, batch folded into lanes: (steps, Cin_pad, Bt*HW).
    x = x_nchw.reshape(B, Cin, HW)
    x = jnp.pad(x, ((0, b_pad - B), (0, cin_pad - Cin), (0, 0)))
    x = x.reshape(steps, bt, cin_pad, HW).transpose(0, 2, 1, 3)
    x = x.reshape(steps, cin_pad, N)

    kernel = functools.partial(dual_conv_kernel, W=W)
    out = pl.pallas_call(
        kernel,
        out_shape=jax.ShapeDtypeStruct((steps, c_pad, N), x_nchw.dtype),
        grid_spec=pltpu.PrefetchScalarGridSpec(
            num_scalar_prefetch=0,
            grid=(steps,),
            in_specs=[
                pl.BlockSpec((1, cin_pad, N), lambda s: (s, 0, 0)),
                pl.BlockSpec((KH * KW - 1, N), lambda s: (0, 0)),          # masks
                pl.BlockSpec((c_pad, KH * KW * cin_pad), lambda s: (0, 0)),
                pl.BlockSpec((c_pad, 1), lambda s: (0, 0)),
                pl.BlockSpec((c_pad, KH * KW * c_pad), lambda s: (0, 0)),
                pl.BlockSpec((c_pad, 1), lambda s: (0, 0)),
            ],
            out_specs=pl.BlockSpec((1, c_pad, N), lambda s: (s, 0, 0)),
        ),
        compiler_params=pltpu.CompilerParams(
            dimension_semantics=("parallel",),
            # TODO(synk): when row-tiling for large HxW is added, re-budget
            # tiles against v7x's 64 MiB physical / ~32 MiB scoped VMEM.
        ),
    )(x, masks, w1s, sh1, w2s, sh2)

    # Undo the batch folding / channel padding: (steps, C_pad, Bt*HW) -> NCHW.
    out = out.reshape(steps, c_pad, bt, HW).transpose(0, 2, 1, 3)
    out = out.reshape(b_pad, c_pad, HW)[:B, :C]
    return out.reshape(B, C, H, W)


def reference_dual_conv_block(x_nchw, params, eps=BN_EPS):
    """Pure-JAX reference: Conv2d + bias -> BN(eval) -> ReLU, twice."""
    (w1, b1, g1, be1, m1, v1, w2, b2, g2, be2, m2, v2) = params

    def block(x, w, b, g, be, m, v):
        y = jax.lax.conv_general_dilated(
            x, w, window_strides=(STRIDE, STRIDE),
            padding=[(PAD, PAD), (PAD, PAD)],
            rhs_dilation=(DILATION, DILATION),
            dimension_numbers=('NCHW', 'OIHW', 'NCHW'))
        y = y + b[None, :, None, None]
        y = (y - m[None, :, None, None]) / jnp.sqrt(v[None, :, None, None] + eps)
        y = y * g[None, :, None, None] + be[None, :, None, None]
        return jnp.maximum(y, 0.0)

    y = block(x_nchw, w1, b1, g1, be1, m1, v1)
    return block(y, w2, b2, g2, be2, m2, v2)


if __name__ == "__main__":
    B, Cin, Cout, H, W = 2, 4, 8, 16, 16
    key = jax.random.PRNGKey(0)
    kx, kw1, kb1, kw2, kb2 = jax.random.split(key, 5)

    x = jax.random.normal(kx, (B, Cin, H, W), dtype=jnp.float32)

    # PyTorch-style parameter shapes (Conv2d OIHW weights, BatchNorm2d stats).
    w1 = jax.random.normal(kw1, (Cout, Cin, KH, KW), jnp.float32) * 0.1
    b1 = jax.random.normal(kb1, (Cout,), jnp.float32) * 0.1
    w2 = jax.random.normal(kw2, (Cout, Cout, KH, KW), jnp.float32) * 0.1
    b2 = jax.random.normal(kb2, (Cout,), jnp.float32) * 0.1
    # BatchNorm2d default affine params / running stats (eval mode).
    g1 = jnp.ones((Cout,), jnp.float32); be1 = jnp.zeros((Cout,), jnp.float32)
    m1 = jnp.zeros((Cout,), jnp.float32); v1 = jnp.ones((Cout,), jnp.float32)
    g2 = jnp.ones((Cout,), jnp.float32); be2 = jnp.zeros((Cout,), jnp.float32)
    m2 = jnp.zeros((Cout,), jnp.float32); v2 = jnp.ones((Cout,), jnp.float32)

    params = (w1, b1, g1, be1, m1, v1, w2, b2, g2, be2, m2, v2)

    out = jax.block_until_ready(dual_conv_block(x, params))
    ref = jax.block_until_ready(reference_dual_conv_block(x, params))

    assert out.shape == (B, Cout, H, W), out.shape
    max_err = float(jnp.max(jnp.abs(out - ref)))
    assert jnp.allclose(out, ref, atol=1e-4, rtol=1e-4), max_err
    print("KERNEL_OK")
</pallas_src>

<mosaic_0001>
module attributes {stable_mosaic.version = 11 : i64} {
  func.func @dual_conv_kernel(%arg0: i32, %arg1: memref<1x8x256xf32, #tpu.memory_space<vmem>>, %arg2: memref<8x256xf32, #tpu.memory_space<vmem>>, %arg3: memref<8x72xf32, #tpu.memory_space<vmem>>, %arg4: memref<8x1xf32, #tpu.memory_space<vmem>>, %arg5: memref<8x72xf32, #tpu.memory_space<vmem>>, %arg6: memref<8x1xf32, #tpu.memory_space<vmem>>, %arg7: memref<1x8x256xf32, #tpu.memory_space<vmem>>) attributes {dimension_semantics = [#tpu.dimension_semantics<parallel>], iteration_bounds = array<i64: 2>, scalar_prefetch = 0 : i64, scratch_operands = 0 : i64, tpu.core_type = #tpu.core_type<tc>, window_params = [{transform_indices = @transform_0, window_bounds = array<i64: 1, 8, 256>}, {pipeline_mode = #tpu.pipeline_mode<synchronous>, transform_indices = @transform_1, window_bounds = array<i64: 8, 256>}, {pipeline_mode = #tpu.pipeline_mode<synchronous>, transform_indices = @transform_2, window_bounds = array<i64: 8, 72>}, {pipeline_mode = #tpu.pipeline_mode<synchronous>, transform_indices = @transform_3, window_bounds = array<i64: 8, 1>}, {pipeline_mode = #tpu.pipeline_mode<synchronous>, transform_indices = @transform_4, window_bounds = array<i64: 8, 72>}, {pipeline_mode = #tpu.pipeline_mode<synchronous>, transform_indices = @transform_5, window_bounds = array<i64: 8, 1>}, {transform_indices = @transform_6, window_bounds = array<i64: 1, 8, 256>}]} {
    %c0 = arith.constant 0 : index
    %c0_0 = arith.constant 0 : index
    %c0_1 = arith.constant 0 : index
    %0 = vector.load %arg1[%c0, %c0_0, %c0_1] : memref<1x8x256xf32, #tpu.memory_space<vmem>>, vector<1x8x256xf32>
    %1 = vector.shape_cast %0 : vector<1x8x256xf32> to vector<8x256xf32>
    %c17_i32 = arith.constant 17 : i32
    %2 = tpu.dynamic_rotate %1 by %c17_i32 dim 1 : vector<8x256xf32>, i32 -> vector<8x256xf32>
    %c0_2 = arith.constant 0 : index
    %c0_3 = arith.constant 0 : index
    %3 = vector.load %arg2[%c0_2, %c0_3] : memref<8x256xf32, #tpu.memory_space<vmem>>, vector<1x256xf32>
    %4 = vector.broadcast %3 : vector<1x256xf32> to vector<8x256xf32>
    %5 = arith.mulf %2, %4 : vector<8x256xf32>
    %c16_i32 = arith.constant 16 : i32
    %6 = tpu.dynamic_rotate %1 by %c16_i32 dim 1 : vector<8x256xf32>, i32 -> vector<8x256xf32>
    %c1 = arith.constant 1 : index
    %c0_4 = arith.constant 0 : index
    %7 = vector.load %arg2[%c1, %c0_4] : memref<8x256xf32, #tpu.memory_space<vmem>>, vector<1x256xf32>
    %8 = vector.broadcast %7 : vector<1x256xf32> to vector<8x256xf32>
    %9 = arith.mulf %6, %8 : vector<8x256xf32>
    %c15_i32 = arith.constant 15 : i32
    %10 = tpu.dynamic_rotate %1 by %c15_i32 dim 1 : vector<8x256xf32>, i32 -> vector<8x256xf32>
    %c2 = arith.constant 2 : index
    %c0_5 = arith.constant 0 : index
    %11 = vector.load %arg2[%c2, %c0_5] : memref<8x256xf32, #tpu.memory_space<vmem>>, vector<1x256xf32>
    %12 = vector.broadcast %11 : vector<1x256xf32> to vector<8x256xf32>
    %13 = arith.mulf %10, %12 : vector<8x256xf32>
    %c1_i32 = arith.constant 1 : i32
    %14 = tpu.dynamic_rotate %1 by %c1_i32 dim 1 : vector<8x256xf32>, i32 -> vector<8x256xf32>
    %c3 = arith.constant 3 : index
    %c0_6 = arith.constant 0 : index
    %15 = vector.load %arg2[%c3, %c0_6] : memref<8x256xf32, #tpu.memory_space<vmem>>, vector<1x256xf32>
    %16 = vector.broadcast %15 : vector<1x256xf32> to vector<8x256xf32>
    %17 = arith.mulf %14, %16 : vector<8x256xf32>
    %c255_i32 = arith.constant 255 : i32
    %18 = tpu.dynamic_rotate %1 by %c255_i32 dim 1 : vector<8x256xf32>, i32 -> vector<8x256xf32>
    %c4 = arith.constant 4 : index
    %c0_7 = arith.constant 0 : index
    %19 = vector.load %arg2[%c4, %c0_7] : memref<8x256xf32, #tpu.memory_space<vmem>>, vector<1x256xf32>
    %20 = vector.broadcast %19 : vector<1x256xf32> to vector<8x256xf32>
    %21 = arith.mulf %18, %20 : vector<8x256xf32>
    %c241_i32 = arith.constant 241 : i32
    %22 = tpu.dynamic_rotate %1 by %c241_i32 dim 1 : vector<8x256xf32>, i32 -> vector<8x256xf32>
    %c5 = arith.constant 5 : index
    %c0_8 = arith.constant 0 : index
    %23 = vector.load %arg2[%c5, %c0_8] : memref<8x256xf32, #tpu.memory_space<vmem>>, vector<1x256xf32>
    %24 = vector.broadcast %23 : vector<1x256xf32> to vector<8x256xf32>
    %25 = arith.mulf %22, %24 : vector<8x256xf32>
    %c240_i32 = arith.constant 240 : i32
    %26 = tpu.dynamic_rotate %1 by %c240_i32 dim 1 : vector<8x256xf32>, i32 -> vector<8x256xf32>
    %c6 = arith.constant 6 : index
    %c0_9 = arith.constant 0 : index
    %27 = vector.load %arg2[%c6, %c0_9] : memref<8x256xf32, #tpu.memory_space<vmem>>, vector<1x256xf32>
    %28 = vector.broadcast %27 : vector<1x256xf32> to vector<8x256xf32>
    %29 = arith.mulf %26, %28 : vector<8x256xf32>
    %c239_i32 = arith.constant 239 : i32
    %30 = tpu.dynamic_rotate %1 by %c239_i32 dim 1 : vector<8x256xf32>, i32 -> vector<8x256xf32>
    %c7 = arith.constant 7 : index
    %c0_10 = arith.constant 0 : index
    %31 = vector.load %arg2[%c7, %c0_10] : memref<8x256xf32, #tpu.memory_space<vmem>>, vector<1x256xf32>
    %32 = vector.broadcast %31 : vector<1x256xf32> to vector<8x256xf32>
    %33 = arith.mulf %30, %32 : vector<8x256xf32>
    %34 = tpu.concatenate %5, %9, %13, %17, %1, %21, %25, %29, %33 in 0 : vector<8x256xf32>, vector<8x256xf32>, vector<8x256xf32>, vector<8x256xf32>, vector<8x256xf32>, vector<8x256xf32>, vector<8x256xf32>, vector<8x256xf32>, vector<8x256xf32> -> vector<72x256xf32>
    %c0_11 = arith.constant 0 : index
    %c0_12 = arith.constant 0 : index
    %35 = vector.load %arg3[%c0_11, %c0_12] : memref<8x72xf32, #tpu.memory_space<vmem>>, vector<8x72xf32>
    %cst = arith.constant dense<0.000000e+00> : vector<8x256xf32>
    %36 = tpu.matmul %35, %34, %cst {dimension_numbers = #tpu.dot_dimension_numbers<[1], [0], [0], [1], [0, 0, 1, 1], [], []>} : vector<8x72xf32>, vector<72x256xf32>, vector<8x256xf32> -> vector<8x256xf32>
    %c0_13 = arith.constant 0 : index
    %c0_14 = arith.constant 0 : index
    %37 = vector.load %arg4[%c0_13, %c0_14] : memref<8x1xf32, #tpu.memory_space<vmem>>, vector<8x1xf32>
    %38 = vector.broadcast %37 : vector<8x1xf32> to vector<8x256xf32>
    %39 = arith.addf %36, %38 : vector<8x256xf32>
    %cst_15 = arith.constant 0.000000e+00 : f32
    %40 = vector.broadcast %cst_15 : f32 to vector<8x256xf32>
    %41 = arith.maximumf %39, %40 : vector<8x256xf32>
    %c17_i32_16 = arith.constant 17 : i32
    %42 = tpu.dynamic_rotate %41 by %c17_i32_16 dim 1 : vector<8x256xf32>, i32 -> vector<8x256xf32>
    %c0_17 = arith.constant 0 : index
    %c0_18 = arith.constant 0 : index
    %43 = vector.load %arg2[%c0_17, %c0_18] : memref<8x256xf32, #tpu.memory_space<vmem>>, vector<1x256xf32>
    %44 = vector.broadcast %43 : vector<1x256xf32> to vector<8x256xf32>
    %45 = arith.mulf %42, %44 : vector<8x256xf32>
    %c16_i32_19 = arith.constant 16 : i32
    %46 = tpu.dynamic_rotate %41 by %c16_i32_19 dim 1 : vector<8x256xf32>, i32 -> vector<8x256xf32>
    %c1_20 = arith.constant 1 : index
    %c0_21 = arith.constant 0 : index
    %47 = vector.load %arg2[%c1_20, %c0_21] : memref<8x256xf32, #tpu.memory_space<vmem>>, vector<1x256xf32>
    %48 = vector.broadcast %47 : vector<1x256xf32> to vector<8x256xf32>
    %49 = arith.mulf %46, %48 : vector<8x256xf32>
    %c15_i32_22 = arith.constant 15 : i32
    %50 = tpu.dynamic_rotate %41 by %c15_i32_22 dim 1 : vector<8x256xf32>, i32 -> vector<8x256xf32>
    %c2_23 = arith.constant 2 : index
    %c0_24 = arith.constant 0 : index
    %51 = vector.load %arg2[%c2_23, %c0_24] : memref<8x256xf32, #tpu.memory_space<vmem>>, vector<1x256xf32>
    %52 = vector.broadcast %51 : vector<1x256xf32> to vector<8x256xf32>
    %53 = arith.mulf %50, %52 : vector<8x256xf32>
    %c1_i32_25 = arith.constant 1 : i32
    %54 = tpu.dynamic_rotate %41 by %c1_i32_25 dim 1 : vector<8x256xf32>, i32 -> vector<8x256xf32>
    %c3_26 = arith.constant 3 : index
    %c0_27 = arith.constant 0 : index
    %55 = vector.load %arg2[%c3_26, %c0_27] : memref<8x256xf32, #tpu.memory_space<vmem>>, vector<1x256xf32>
    %56 = vector.broadcast %55 : vector<1x256xf32> to vector<8x256xf32>
    %57 = arith.mulf %54, %56 : vector<8x256xf32>
    %c255_i32_28 = arith.constant 255 : i32
    %58 = tpu.dynamic_rotate %41 by %c255_i32_28 dim 1 : vector<8x256xf32>, i32 -> vector<8x256xf32>
    %c4_29 = arith.constant 4 : index
    %c0_30 = arith.constant 0 : index
    %59 = vector.load %arg2[%c4_29, %c0_30] : memref<8x256xf32, #tpu.memory_space<vmem>>, vector<1x256xf32>
    %60 = vector.broadcast %59 : vector<1x256xf32> to vector<8x256xf32>
    %61 = arith.mulf %58, %60 : vector<8x256xf32>
    %c241_i32_31 = arith.constant 241 : i32
    %62 = tpu.dynamic_rotate %41 by %c241_i32_31 dim 1 : vector<8x256xf32>, i32 -> vector<8x256xf32>
    %c5_32 = arith.constant 5 : index
    %c0_33 = arith.constant 0 : index
    %63 = vector.load %arg2[%c5_32, %c0_33] : memref<8x256xf32, #tpu.memory_space<vmem>>, vector<1x256xf32>
    %64 = vector.broadcast %63 : vector<1x256xf32> to vector<8x256xf32>
    %65 = arith.mulf %62, %64 : vector<8x256xf32>
    %c240_i32_34 = arith.constant 240 : i32
    %66 = tpu.dynamic_rotate %41 by %c240_i32_34 dim 1 : vector<8x256xf32>, i32 -> vector<8x256xf32>
    %c6_35 = arith.constant 6 : index
    %c0_36 = arith.constant 0 : index
    %67 = vector.load %arg2[%c6_35, %c0_36] : memref<8x256xf32, #tpu.memory_space<vmem>>, vector<1x256xf32>
    %68 = vector.broadcast %67 : vector<1x256xf32> to vector<8x256xf32>
    %69 = arith.mulf %66, %68 : vector<8x256xf32>
    %c239_i32_37 = arith.constant 239 : i32
    %70 = tpu.dynamic_rotate %41 by %c239_i32_37 dim 1 : vector<8x256xf32>, i32 -> vector<8x256xf32>
    %c7_38 = arith.constant 7 : index
    %c0_39 = arith.constant 0 : index
    %71 = vector.load %arg2[%c7_38, %c0_39] : memref<8x256xf32, #tpu.memory_space<vmem>>, vector<1x256xf32>
    %72 = vector.broadcast %71 : vector<1x256xf32> to vector<8x256xf32>
    %73 = arith.mulf %70, %72 : vector<8x256xf32>
    %74 = tpu.concatenate %45, %49, %53, %57, %41, %61, %65, %69, %73 in 0 : vector<8x256xf32>, vector<8x256xf32>, vector<8x256xf32>, vector<8x256xf32>, vector<8x256xf32>, vector<8x256xf32>, vector<8x256xf32>, vector<8x256xf32>, vector<8x256xf32> -> vector<72x256xf32>
    %c0_40 = arith.constant 0 : index
    %c0_41 = arith.constant 0 : index
    %75 = vector.load %arg5[%c0_40, %c0_41] : memref<8x72xf32, #tpu.memory_space<vmem>>, vector<8x72xf32>
    %cst_42 = arith.constant dense<0.000000e+00> : vector<8x256xf32>
    %76 = tpu.matmul %75, %74, %cst_42 {dimension_numbers = #tpu.dot_dimension_numbers<[1], [0], [0], [1], [0, 0, 1, 1], [], []>} : vector<8x72xf32>, vector<72x256xf32>, vector<8x256xf32> -> vector<8x256xf32>
    %c0_43 = arith.constant 0 : index
    %c0_44 = arith.constant 0 : index
    %77 = vector.load %arg6[%c0_43, %c0_44] : memref<8x1xf32, #tpu.memory_space<vmem>>, vector<8x1xf32>
    %78 = vector.broadcast %77 : vector<8x1xf32> to vector<8x256xf32>
    %79 = arith.addf %76, %78 : vector<8x256xf32>
    %cst_45 = arith.constant 0.000000e+00 : f32
    %80 = vector.broadcast %cst_45 : f32 to vector<8x256xf32>
    %81 = arith.maximumf %79, %80 : vector<8x256xf32>
    %c0_46 = arith.constant 0 : index
    %c0_47 = arith.constant 0 : index
    %c0_48 = arith.constant 0 : index
    %82 = vector.load %arg7[%c0_46, %c0_47, %c0_48] : memref<1x8x256xf32, #tpu.memory_space<vmem>>, vector<1x8x256xf32>
    %83 = vector.shape_cast %82 : vector<1x8x256xf32> to vector<8x256xf32>
    %84 = vector.shape_cast %81 : vector<8x256xf32> to vector<1x8x256xf32>
    tpu.vector_store %arg7[%c0_46, %c0_47, %c0_48], %84 {strides = array<i32>} : memref<1x8x256xf32, #tpu.memory_space<vmem>>, vector<1x8x256xf32>,
    return
  }
  func.func @transform_0(%arg0: i32) -> (i32, i32, i32) {
    %c0_i32 = arith.constant 0 : i32
    %c0_i32_0 = arith.constant 0 : i32
    %c0_i32_1 = arith.constant 0 : i32
    return %arg0, %c0_i32, %c0_i32_0 : i32, i32, i32
  }
  func.func @transform_1(%arg0: i32) -> (i32, i32) {
    %c0_i32 = arith.constant 0 : i32
    %c0_i32_0 = arith.constant 0 : i32
    %c0_i32_1 = arith.constant 0 : i32
    return %c0_i32, %c0_i32_0 : i32, i32
  }
  func.func @transform_2(%arg0: i32) -> (i32, i32) {
    %c0_i32 = arith.constant 0 : i32
    %c0_i32_0 = arith.constant 0 : i32
    %c0_i32_1 = arith.constant 0 : i32
    return %c0_i32, %c0_i32_0 : i32, i32
  }
  func.func @transform_3(%arg0: i32) -> (i32, i32) {
    %c0_i32 = arith.constant 0 : i32
    %c0_i32_0 = arith.constant 0 : i32
    %c0_i32_1 = arith.constant 0 : i32
    return %c0_i32, %c0_i32_0 : i32, i32
  }
  func.func @transform_4(%arg0: i32) -> (i32, i32) {
    %c0_i32 = arith.constant 0 : i32
    %c0_i32_0 = arith.constant 0 : i32
    %c0_i32_1 = arith.constant 0 : i32
    return %c0_i32, %c0_i32_0 : i32, i32
  }
  func.func @transform_5(%arg0: i32) -> (i32, i32) {
    %c0_i32 = arith.constant 0 : i32
    %c0_i32_0 = arith.constant 0 : i32
    %c0_i32_1 = arith.constant 0 : i32
    return %c0_i32, %c0_i32_0 : i32, i32
  }
  func.func @transform_6(%arg0: i32) -> (i32, i32, i32) {
    %c0_i32 = arith.constant 0 : i32
    %c0_i32_0 = arith.constant 0 : i32
    %c0_i32_1 = arith.constant 0 : i32
    return %arg0, %c0_i32, %c0_i32_0 : i32, i32, i32
  }
}

</mosaic_0001>

<llo_original>
// kernel: tpu_custom_call.1
$region0: #{tpu_custom_call.1}
  #allocation0 [shape = 'u32[]', space=smem, size = 0x4, offset = 0x4, fixed_abs, tag = 'smem constant byte address 0x4 - core index']
  #allocation1 [shape = 'u32[144,128]{1,0:T(1,128)}', space=vmem, size = 0x12000, scoped, tag = 'internal scratch']
  %s0 = inlined_call_operand.hbm [shape: f32[2,8,256], index: 0, kind: input, shape index: {}]
  %s1 = inlined_call_operand.vmem [shape: f32[8,256], index: 1, kind: input, shape index: {}]
  %s2 = inlined_call_operand.vmem [shape: f32[8,72], index: 2, kind: input, shape index: {}]
  %s3 = inlined_call_operand.vmem [shape: f32[8,1], index: 3, kind: input, shape index: {}]
  %s4 = inlined_call_operand.vmem [shape: f32[8,72], index: 4, kind: input, shape index: {}]
  %s5 = inlined_call_operand.vmem [shape: f32[8,1], index: 5, kind: input, shape index: {}]
  %s6 = inlined_call_operand.hbm [shape: f32[2,8,256], index: 6, kind: output, shape index: {}]
  %s7 = sld [smem:[#allocation0]]
  $region61: #{tpu_custom_call.1} parent=0
    _
  %s9 = ssub.s32 1, %s7
  %s10 = scalar_select 0, %s9, %s7
  $region1: #{tpu_custom_call.1} parent=0
    #allocation2 [shape = 'u8[16384]{0}', space=vmem, size = 0x4000, scoped, tag = 'input window, operand 0']
    #allocation3 [shape = 's32[2]{0}', space=sflag, size = 0x8, scoped, tag = 'scoped memory for tpu_custom_call.1']
    #allocation4 [shape = 's32[2]{0}', space=sflag, size = 0x8, scoped, tag = 'scoped memory for tpu_custom_call.1']
    #allocation5 [shape = 'u8[16384]{0}', space=vmem, size = 0x4000, scoped, tag = 'output window, operand 0']
    %11 = vsyncpa [#allocation3], 0
    %s12 = scalar_lea.sflag [#allocation3], 1
    %13 = vsyncpa %s12, 0
    %14 = vsyncpa [#allocation4], 0
    %s15 = scalar_lea.sflag [#allocation4], 1
    %16 = vsyncpa %s15, 0
    loop: start=0, step=1, limit=4
    $region2: #{tpu_custom_call.1} parent=1 // loop_pre_header
      _
    $region3: #{tpu_custom_call.1} parent=1 // loop_header
      %s18 = sphi 0, %s22
      %p19 = scmp.ge.s32.totalorder %s18, 4
      %s28 = sphi 0, %s30
      %s31 = sphi 0, %s28
      %s32 = sphi 0, %s31
      %s48 = sphi 0, %s32
      %s52 = sphi 0, %s52
      %s54 = sphi 0, %s52
      %s55 = sphi 0, %s54
      %s69 = sphi 0, %s55
      %s73 = sphi 0, %s73
      %s75 = sphi 0, %s73
      %s76 = sphi 0, %s75
      %s90 = sphi 0, %s76
      %s94 = sphi 0, %s94
      %s96 = sphi 0, %s94
      %s97 = sphi 0, %s96
      %s111 = sphi 0, %s97
      %s115 = sphi 0, %s115
      %s117 = sphi 0, %s115
      %s118 = sphi 0, %s117
      %s132 = sphi 0, %s118
      %s136 = sphi 0, %s136
      %s138 = sphi 0, %s136
      %s139 = sphi 0, %s138
      %s153 = sphi 0, %s139
      %s159 = sphi 0, %s161
      %s162 = sphi 0, %s159
      %s163 = sphi 0, %s162
      %s179 = sphi 0, %s163
    $region4: #{tpu_custom_call.1} parent=1 // loop_header_branch
      %21 = sbr.rel (%p19) target = $region8
    $region5: #{tpu_custom_call.1} parent=1 // loop_body
      %s23 = ssub.s32 %s18, 1
      %s24 = ssub.s32 %s18, 2
      %s25 = sadd.s32 %s18, 1
      %s26 = ssub.s32 %s18, %s25
      %p27 = scmp.eq.s32.totalorder %s26, 0
      %s29 = sadd.s32 %s28, 1
      %s30 = scalar_select %p27, %s28, %s29
      %p33 = pneg %p27
      %p34 = scmp.eq.s32.totalorder %s18, 1
      %p35 = por %p33, %p34
      %p36 = scmp.ne.s32.totalorder %s28, %s31
      %p37 = scmp.eq.s32.totalorder %s18, 0
      %p38 = por %p36, %p37
      %p39 = scmp.ne.s32.totalorder %s28, %s31
      %p40 = scmp.eq.s32.totalorder %s23, 1
      %p41 = por %p39, %p40
      %p42 = scmp.ne.s32.totalorder %s31, %s32
      %p43 = scmp.eq.s32.totalorder %s23, 0
      %p44 = por %p42, %p43
      %p45 = scmp.ne.s32.totalorder %s31, %s32
      %p46 = scmp.eq.s32.totalorder %s24, 1
      %p47 = por %p45, %p46
      %p49 = scmp.ne.s32.totalorder %s32, %s48
      %p50 = scmp.eq.s32.totalorder %s24, 0
      %p51 = por %p49, %p50
      %s53 = sadd.s32 %s52, 1
      %p56 = scmp.eq.s32.totalorder %s18, 1
      %p57 = scmp.ne.s32.totalorder %s52, %s54
      %p58 = scmp.eq.s32.totalorder %s18, 0
      %p59 = por %p57, %p58
      %p60 = scmp.ne.s32.totalorder %s52, %s54
      %p61 = scmp.eq.s32.totalorder %s23, 1
      %p62 = por %p60, %p61
      %p63 = scmp.ne.s32.totalorder %s54, %s55
      %p64 = scmp.eq.s32.totalorder %s23, 0
      %p65 = por %p63, %p64
      %p66 = scmp.ne.s32.totalorder %s54, %s55
      %p67 = scmp.eq.s32.totalorder %s24, 1
      %p68 = por %p66, %p67
      %p70 = scmp.ne.s32.totalorder %s55, %s69
      %p71 = scmp.eq.s32.totalorder %s24, 0
      %p72 = por %p70, %p71
      %s74 = sadd.s32 %s73, 1
      %p77 = scmp.eq.s32.totalorder %s18, 1
      %p78 = scmp.ne.s32.totalorder %s73, %s75
      %p79 = scmp.eq.s32.totalorder %s18, 0
      %p80 = por %p78, %p79
      %p81 = scmp.ne.s32.totalorder %s73, %s75
      %p82 = scmp.eq.s32.totalorder %s23, 1
      %p83 = por %p81, %p82
      %p84 = scmp.ne.s32.totalorder %s75, %s76
      %p85 = scmp.eq.s32.totalorder %s23, 0
      %p86 = por %p84, %p85
      %p87 = scmp.ne.s32.totalorder %s75, %s76
      %p88 = scmp.eq.s32.totalorder %s24, 1
      %p89 = por %p87, %p88
      %p91 = scmp.ne.s32.totalorder %s76, %s90
      %p92 = scmp.eq.s32.totalorder %s24, 0
      %p93 = por %p91, %p92
      %s95 = sadd.s32 %s94, 1
      %p98 = scmp.eq.s32.totalorder %s18, 1
      %p99 = scmp.ne.s32.totalorder %s94, %s96
      %p100 = scmp.eq.s32.totalorder %s18, 0
      %p101 = por %p99, %p100
      %p102 = scmp.ne.s32.totalorder %s94, %s96
      %p103 = scmp.eq.s32.totalorder %s23, 1
      %p104 = por %p102, %p103
      %p105 = scmp.ne.s32.totalorder %s96, %s97
      %p106 = scmp.eq.s32.totalorder %s23, 0
      %p107 = por %p105, %p106
      %p108 = scmp.ne.s32.totalorder %s96, %s97
      %p109 = scmp.eq.s32.totalorder %s24, 1
      %p110 = por %p108, %p109
      %p112 = scmp.ne.s32.totalorder %s97, %s111
      %p113 = scmp.eq.s32.totalorder %s24, 0
      %p114 = por %p112, %p113
      %s116 = sadd.s32 %s115, 1
      %p119 = scmp.eq.s32.totalorder %s18, 1
      %p120 = scmp.ne.s32.totalorder %s115, %s117
      %p121 = scmp.eq.s32.totalorder %s18, 0
      %p122 = por %p120, %p121
      %p123 = scmp.ne.s32.totalorder %s115, %s117
      %p124 = scmp.eq.s32.totalorder %s23, 1
      %p125 = por %p123, %p124
      %p126 = scmp.ne.s32.totalorder %s117, %s118
      %p127 = scmp.eq.s32.totalorder %s23, 0
      %p128 = por %p126, %p127
      %p129 = scmp.ne.s32.totalorder %s117, %s118
      %p130 = scmp.eq.s32.totalorder %s24, 1
      %p131 = por %p129, %p130
      %p133 = scmp.ne.s32.totalorder %s118, %s132
      %p134 = scmp.eq.s32.totalorder %s24, 0
      %p135 = por %p133, %p134
      %s137 = sadd.s32 %s136, 1
      %p140 = scmp.eq.s32.totalorder %s18, 1
      %p141 = scmp.ne.s32.totalorder %s136, %s138
      %p142 = scmp.eq.s32.totalorder %s18, 0
      %p143 = por %p141, %p142
      %p144 = scmp.ne.s32.totalorder %s136, %s138
      %p145 = scmp.eq.s32.totalorder %s23, 1
      %p146 = por %p144, %p145
      %p147 = scmp.ne.s32.totalorder %s138, %s139
      %p148 = scmp.eq.s32.totalorder %s23, 0
      %p149 = por %p147, %p148
      %p150 = scmp.ne.s32.totalorder %s138, %s139
      %p151 = scmp.eq.s32.totalorder %s24, 1
      %p152 = por %p150, %p151
      %p154 = scmp.ne.s32.totalorder %s139, %s153
      %p155 = scmp.eq.s32.totalorder %s24, 0
      %p156 = por %p154, %p155
      %s157 = ssub.s32 %s18, %s25
      %p158 = scmp.eq.s32.totalorder %s157, 0
      %s160 = sadd.s32 %s159, 1
      %s161 = scalar_select %p158, %s159, %s160
      %p164 = pneg %p158
      %p165 = scmp.eq.s32.totalorder %s18, 1
      %p166 = por %p164, %p165
      %p167 = scmp.ne.s32.totalorder %s159, %s162
      %p168 = scmp.eq.s32.totalorder %s18, 0
      %p169 = por %p167, %p168
      %p170 = scmp.ne.s32.totalorder %s159, %s162
      %p171 = scmp.eq.s32.totalorder %s23, 1
      %p172 = por %p170, %p171
      %p173 = scmp.ne.s32.totalorder %s162, %s163
      %p174 = scmp.eq.s32.totalorder %s23, 0
      %p175 = por %p173, %p174
      %p176 = scmp.ne.s32.totalorder %s162, %s163
      %p177 = scmp.eq.s32.totalorder %s24, 1
      %p178 = por %p176, %p177
      %p180 = scmp.ne.s32.totalorder %s163, %s179
      %p181 = scmp.eq.s32.totalorder %s24, 0
      %p182 = por %p180, %p181
      %p183 = scmp.le.s32.totalorder 1, %s18
      %p184 = scmp.lt.s32.totalorder %s18, 3
      %p185 = pnand %p183, %p184
      %p186 = pneg %p185
      // Predicated region
      $region9: #{tpu_custom_call.1} parent=5 // pred_check
        _
      $region10: #{tpu_custom_call.1} parent=5 // pred_check_branch
        %188 = sbr.rel (%p185) target = $region12
      $region11: #{tpu_custom_call.1} parent=5 // pred_region
        %s189 = ssub.s32 %s18, 1
        // Predicated region
        $region13: #{tpu_custom_call.1} parent=11 // pred_check
          %p190 = pneg %p65
        $region14: #{tpu_custom_call.1} parent=11 // pred_check_branch
          %192 = sbr.rel (%p190) target = $region16
        $region15: #{tpu_custom_call.1} parent=11 // pred_region
          _
        $region16: #{tpu_custom_call.1} parent=11 // pred_fallthru
          _
        // Predicated region
        $region17: #{tpu_custom_call.1} parent=11 // pred_check
          %p193 = pneg %p86
        $region18: #{tpu_custom_call.1} parent=11 // pred_check_branch
          %195 = sbr.rel (%p193) target = $region20
        $region19: #{tpu_custom_call.1} parent=11 // pred_region
          _
        $region20: #{tpu_custom_call.1} parent=11 // pred_fallthru
          _
        // Predicated region
        $region21: #{tpu_custom_call.1} parent=11 // pred_check
          %p196 = pneg %p107
        $region22: #{tpu_custom_call.1} parent=11 // pred_check_branch
          %198 = sbr.rel (%p196) target = $region24
        $region23: #{tpu_custom_call.1} parent=11 // pred_region
          _
        $region24: #{tpu_custom_call.1} parent=11 // pred_fallthru
          _
        // Predicated region
        $region25: #{tpu_custom_call.1} parent=11 // pred_check
          %p199 = pneg %p128
        $region26: #{tpu_custom_call.1} parent=11 // pred_check_branch
          %201 = sbr.rel (%p199) target = $region28
        $region27: #{tpu_custom_call.1} parent=11 // pred_region
          _
        $region28: #{tpu_custom_call.1} parent=11 // pred_fallthru
          _
        // Predicated region
        $region29: #{tpu_custom_call.1} parent=11 // pred_check
          %p202 = pneg %p149
        $region30: #{tpu_custom_call.1} parent=11 // pred_check_branch
          %204 = sbr.rel (%p202) target = $region32
        $region31: #{tpu_custom_call.1} parent=11 // pred_region
          _
        $region32: #{tpu_custom_call.1} parent=11 // pred_fallthru
          _
      $region12: #{tpu_custom_call.1} parent=5 // pred_fallthru
        _
      %p205 = scmp.lt.s32.totalorder %s18, 2
      // Predicated region
      $region33: #{tpu_custom_call.1} parent=5 // pred_check
        %p206 = pneg %p205
      $region34: #{tpu_custom_call.1} parent=5 // pred_check_branch
        %208 = sbr.rel (%p206) target = $region36
      $region35: #{tpu_custom_call.1} parent=5 // pred_region
        // Predicated region
        $region37: #{tpu_custom_call.1} parent=35 // pred_check
          %p209 = pneg %p38
        $region38: #{tpu_custom_call.1} parent=35 // pred_check_branch
          %211 = sbr.rel (%p209) target = $region40
        $region39: #{tpu_custom_call.1} parent=35 // pred_region
          %s212 = sand.u32 %s28, 1
          %s213 = scalar_lea.sflag [#allocation3], %s212
          %s214 = sand.u32 %s28, 1
          %s215 = smul.addr %s214, 16
          %s216 = scalar_lea.vmem [#allocation2], %s215
          %s218 = ssub.s32 256, 256
          %219 = vsyncadd %s213, %s218
          %s220 = smul.addr %s18, 2
          %s221 = smul.addr %s220, 128
          %s222 = scalar_lea.hbm %s0, %s221
          %s224 = sshll.u32 %s216, 4
          %s225 = int_to_ptr.vmem [resolvable:$true] %s224
          %227 = dma.hbm_to_vmem [thread:$0]  %s222, 256, %s225, %s213
        $region40: #{tpu_custom_call.1} parent=35 // pred_fallthru
          _
      $region36: #{tpu_custom_call.1} parent=5 // pred_fallthru
        _
      %p228 = scmp.le.s32.totalorder 1, %s18
      %p229 = scmp.lt.s32.totalorder %s18, 3
      %p230 = pnand %p228, %p229
      %p231 = pneg %p230
      // Predicated region
      $region41: #{tpu_custom_call.1} parent=5 // pred_check
        _
      $region42: #{tpu_custom_call.1} parent=5 // pred_check_branch
        %233 = sbr.rel (%p230) target = $region44
      $region43: #{tpu_custom_call.1} parent=5 // pred_region
        %s234 = ssub.s32 %s18, 1
        %s235 = sand.u32 %s31, 1
        %s236 = scalar_lea.sflag [#allocation3], %s235
        %s237 = sand.u32 %s31, 1
        %s238 = smul.addr %s237, 16
        %s239 = scalar_lea.vmem [#allocation2], %s238
        // Predicated region
        $region45: #{tpu_custom_call.1} parent=43 // pred_check
          %p240 = pneg %p44
        $region46: #{tpu_custom_call.1} parent=43 // pred_check_branch
          %242 = sbr.rel (%p240) target = $region48
        $region47: #{tpu_custom_call.1} parent=43 // pred_region
          %243 = dma.done %s236, 256
        $region48: #{tpu_custom_call.1} parent=43 // pred_fallthru
          _
        %s244 = sand.u32 %s31, 1
        %s245 = scalar_lea.sflag [#allocation3], %s244
        %s246 = sand.u32 %s31, 1
        %s247 = smul.addr %s246, 16
        %s248 = scalar_lea.vmem [#allocation2], %s247
        %p249 = pneg %p44
        %p250 = pneg %p41
        %p251 = pneg %p65
        %p252 = pneg %p62
        %p253 = pneg %p86
        %p254 = pneg %p83
        %p255 = pneg %p107
        %p256 = pneg %p104
        %p257 = pneg %p128
        %p258 = pneg %p125
        %p259 = pneg %p149
        %p260 = pneg %p146
        %p261 = pneg %p175
        %p262 = pneg %p172
        %s263 = sand.u32 %s162, 1
        %s264 = scalar_lea.sflag [#allocation4], %s263
        %s265 = sand.u32 %s162, 1
        %s266 = smul.addr %s265, 16
        %s267 = scalar_lea.vmem [#allocation5], %s266
        %v268 = vld [vmem:[%s239] sm:$0xff]
        %v269 = vld [vmem:[%s239 + $0x8] sm:$0xff]
        %270 = vrot.lane.b32.xlu0 %v268, 17
        %v271 = vpop.permute.xlu0 %270
        %272 = vrot.lane.b32.xlu0 %v269, 17
        %v273 = vpop.permute.xlu0 %272
        %v274 = vlaneseq
        %v275 = vand.u32 %v274, 127
        %vm276 = vcmp.lt.s32.totalorder %v275, 17
        %v277 = vsel %vm276, %v271, %v273
        %v278 = vsel %vm276, %v273, %v271
        %v279 = vld [vmem:[%s1] ss:$8 sm:$0x3]
        %v281 = vlaneseq
        %v282 = vshrl.u32 %v281, 7
        %v283 = vsub.s32 0, %v282
        %v284 = vrot.slane %v279, %v283
        %v285 = vlaneseq
        %v286 = vshrl.u32 %v285, 7
        %v287 = vsub.s32 1, %v286
        %v288 = vrot.slane %v279, %v287
        %v291 = vmul.f32 %v278, %v284
        %v292 = vmul.f32 %v277, %v288
        %293 = vrot.lane.b32.xlu0 %v268, 16
        %v294 = vpop.permute.xlu0 %293
        %295 = vrot.lane.b32.xlu0 %v269, 16
        %v296 = vpop.permute.xlu0 %295
        %vm297 = vcmp.lt.s32.totalorder %v275, 16
        %v298 = vsel %vm297, %v294, %v296
        %v299 = vsel %vm297, %v296, %v294
        %s300 = scalar_lea.vmem %s1, 1
        %v301 = vld [vmem:[%s300] ss:$8 sm:$0x3]
        %v303 = vlaneseq
        %v304 = vshrl.u32 %v303, 7
        %v305 = vsub.s32 0, %v304
        %v306 = vrot.slane %v301, %v305
        %v307 = vlaneseq
        %v308 = vshrl.u32 %v307, 7
        %v309 = vsub.s32 1, %v308
        %v310 = vrot.slane %v301, %v309
        %v313 = vmul.f32 %v299, %v306
        %v314 = vmul.f32 %v298, %v310
        %315 = vrot.lane.b32.xlu0 %v268, 15
        %v316 = vpop.permute.xlu0 %315
        %317 = vrot.lane.b32.xlu0 %v269, 15
        %v318 = vpop.permute.xlu0 %317
        %vm319 = vcmp.lt.s32.totalorder %v275, 15
        %v320 = vsel %vm319, %v316, %v318
        %v321 = vsel %vm319, %v318, %v316
        %s322 = scalar_lea.vmem %s1, 2
        %v323 = vld [vmem:[%s322] ss:$8 sm:$0x3]
        %v325 = vlaneseq
        %v326 = vshrl.u32 %v325, 7
        %v327 = vsub.s32 0, %v326
        %v328 = vrot.slane %v323, %v327
        %v329 = vlaneseq
        %v330 = vshrl.u32 %v329, 7
        %v331 = vsub.s32 1, %v330
        %v332 = vrot.slane %v323, %v331
        %v335 = vmul.f32 %v321, %v328
        %v336 = vmul.f32 %v320, %v332
        %337 = vrot.lane.b32.xlu0 %v268, 1
        %v338 = vpop.permute.xlu0 %337
        %339 = vrot.lane.b32.xlu0 %v269, 1
        %v340 = vpop.permute.xlu0 %339
        %vm341 = vcmp.lt.s32.totalorder %v275, 1
        %v342 = vsel %vm341, %v338, %v340
        %v343 = vsel %vm341, %v340, %v338
        %s344 = scalar_lea.vmem %s1, 3
        %v345 = vld [vmem:[%s344] ss:$8 sm:$0x3]
        %v347 = vlaneseq
        %v348 = vshrl.u32 %v347, 7
        %v349 = vsub.s32 0, %v348
        %v350 = vrot.slane %v345, %v349
        %v351 = vlaneseq
        %v352 = vshrl.u32 %v351, 7
        %v353 = vsub.s32 1, %v352
        %v354 = vrot.slane %v345, %v353
        %v357 = vmul.f32 %v343, %v350
        %v358 = vmul.f32 %v342, %v354
        %359 = vrot.lane.b32.xlu0 %v268, 127
        %v360 = vpop.permute.xlu0 %359
        %361 = vrot.lane.b32.xlu0 %v269, 127
        %v362 = vpop.permute.xlu0 %361
        %vm363 = vcmp.lt.s32.totalorder %v275, 127
        %v364 = vsel %vm363, %v360, %v362
        %v365 = vsel %vm363, %v362, %v360
        %s366 = scalar_lea.vmem %s1, 4
        %v367 = vld [vmem:[%s366] ss:$8 sm:$0x3]
        %v369 = vlaneseq
        %v370 = vshrl.u32 %v369, 7
        %v371 = vsub.s32 0, %v370
        %v372 = vrot.slane %v367, %v371
        %v373 = vlaneseq
        %v374 = vshrl.u32 %v373, 7
        %v375 = vsub.s32 1, %v374
        %v376 = vrot.slane %v367, %v375
        %v379 = vmul.f32 %v364, %v372
        %v380 = vmul.f32 %v365, %v376
        %381 = vrot.lane.b32.xlu0 %v268, 113
        %v382 = vpop.permute.xlu0 %381
        %383 = vrot.lane.b32.xlu0 %v269, 113
        %v384 = vpop.permute.xlu0 %383
        %vm385 = vcmp.lt.s32.totalorder %v275, 113
        %v386 = vsel %vm385, %v382, %v384
        %v387 = vsel %vm385, %v384, %v382
        %s388 = scalar_lea.vmem %s1, 5
        %v389 = vld [vmem:[%s388] ss:$8 sm:$0x3]
        %v391 = vlaneseq
        %v392 = vshrl.u32 %v391, 7
        %v393 = vsub.s32 0, %v392
        %v394 = vrot.slane %v389, %v393
        %v395 = vlaneseq
        %v396 = vshrl.u32 %v395, 7
        %v397 = vsub.s32 1, %v396
        %v398 = vrot.slane %v389, %v397
        %v401 = vmul.f32 %v386, %v394
        %v402 = vmul.f32 %v387, %v398
        %403 = vrot.lane.b32.xlu0 %v268, 112
        %v404 = vpop.permute.xlu0 %403
        %405 = vrot.lane.b32.xlu0 %v269, 112
        %v406 = vpop.permute.xlu0 %405
        %vm407 = vcmp.lt.s32.totalorder %v275, 112
        %v408 = vsel %vm407, %v404, %v406
        %v409 = vsel %vm407, %v406, %v404
        %s410 = scalar_lea.vmem %s1, 6
        %v411 = vld [vmem:[%s410] ss:$8 sm:$0x3]
        %v413 = vlaneseq
        %v414 = vshrl.u32 %v413, 7
        %v415 = vsub.s32 0, %v414
        %v416 = vrot.slane %v411, %v415
        %v417 = vlaneseq
        %v418 = vshrl.u32 %v417, 7
        %v419 = vsub.s32 1, %v418
        %v420 = vrot.slane %v411, %v419
        %v423 = vmul.f32 %v408, %v416
        %v424 = vmul.f32 %v409, %v420
        %425 = vrot.lane.b32.xlu0 %v268, 111
        %v426 = vpop.permute.xlu0 %425
        %427 = vrot.lane.b32.xlu0 %v269, 111
        %v428 = vpop.permute.xlu0 %427
        %vm429 = vcmp.lt.s32.totalorder %v275, 111
        %v430 = vsel %vm429, %v426, %v428
        %v431 = vsel %vm429, %v428, %v426
        %s432 = scalar_lea.vmem %s1, 7
        %v433 = vld [vmem:[%s432] ss:$8 sm:$0x3]
        %v435 = vlaneseq
        %v436 = vshrl.u32 %v435, 7
        %v437 = vsub.s32 0, %v436
        %v438 = vrot.slane %v433, %v437
        %v439 = vlaneseq
        %v440 = vshrl.u32 %v439, 7
        %v441 = vsub.s32 1, %v440
        %v442 = vrot.slane %v433, %v441
        %v445 = vmul.f32 %v430, %v438
        %v446 = vmul.f32 %v431, %v442
        %v447 = vld [vmem:[%s2] sm:$0xff]
        %v448 = vld [vmem:[%s3] sm:$0xff]
        %450 = vset.pattern.permute.xlu0 0
        %451 = vperm.xlu0 %450, %v448
        %v452 = vpop.permute.xlu0 %451
        %vm454 = vcmask 588800
        %v456 = vsel %vm454, %v447, 0
        %458 = vmatprep.subr.mxu0 %v292
        %459 = vmatpush1.msra.mxu0 %v291
        %460 = vmatprep.subr.mxu0 %v314
        %461 = vmatpush1.msra.mxu0 %v313
        %462 = vmatprep.subr.mxu0 %v336
        %463 = vmatpush1.msra.mxu0 %v335
        %464 = vmatprep.subr.mxu0 %v358
        %465 = vmatpush1.msra.mxu0 %v357
        %466 = vmatprep.subr.mxu0 %v269
        %467 = vmatpush1.msra.mxu0 %v268
        %468 = vmatprep.subr.mxu0 %v380
        %469 = vmatpush1.msra.mxu0 %v379
        %470 = vmatprep.subr.mxu0 %v402
        %471 = vmatpush1.msra.mxu0 %v401
        %472 = vmatprep.subr.mxu0 %v424
        %473 = vmatpush1.msra.mxu0 %v423
        %474 = vmatprep.subr.mxu0 %v446
        %475 = vmatpush1.msra.mxu0 %v445
        %476 = vmatprep.subr.mxu0 0.0
        %477 = vmatpush1.msra.mxu0 0.0
        %478 = vmatprep.subr.mxu0 0.0
        %479 = vmatpush1.msra.mxu0 0.0
        %480 = vmatprep.subr.mxu0 0.0
        %481 = vmatpush1.msra.mxu0 0.0
        %482 = vmatprep.subr.mxu0 0.0
        %483 = vmatpush1.msra.mxu0 0.0
        %484 = vmatprep.subr.mxu0 0.0
        %485 = vmatpush1.msra.mxu0 0.0
        %486 = vmatprep.subr.mxu0 0.0
        %487 = vmatpush1.msra.mxu0 0.0
        %488 = vmatprep.subr.mxu0 0.0
        %489 = vmatpush1.msra.mxu0 0.0
        %490 = vmatprep.subr.mxu0 0.0
        %491 = vmatpush1.msra.mxu0 0.0
        %492 = vmatprep.subr.mxu0 0.0
        %493 = vmatpush1.msra.mxu0 0.0
        %494 = vmatprep.subr.mxu0 0.0
        %495 = vmatpush1.msra.mxu0 0.0
        %496 = vmatprep.subr.mxu0 0.0
        %497 = vmatpush1.msra.mxu0 0.0
        %498 = vmatprep.subr.mxu0 0.0
        %499 = vmatpush1.msra.mxu0 0.0
        %500 = vmatprep.subr.mxu0 0.0
        %501 = vmatpush1.msra.mxu0 0.0
        %502 = vmatprep.subr.mxu0 0.0
        %503 = vmatpush1.msra.mxu0 0.0
        %504 = vmatprep.subr.mxu0 0.0
        %505 = vmatpush1.msra.mxu0 0.0
        %506 = vmatprep.subr.mxu0 0.0
        %507 = vmatpush1.msra.mxu0 0.0
        %508 = vmatprep.subr.mxu0 0.0
        %509 = vmatpush1.msra.mxu0 0.0
        %510 = vmatprep.subr.mxu0 0.0
        %511 = vmatpush1.msra.mxu0 0.0
        %512 = vmatprep.subr.mxu0 0.0
        %513 = vmatpush1.msra.mxu0 0.0
        %514 = vmatprep.subr.mxu0 0.0
        %515 = vmatpush1.msra.mxu0 0.0
        %516 = vmatprep.subr.mxu0 0.0
        %517 = vmatpush1.msra.mxu0 0.0
        %518 = vmatprep.subr.mxu0 0.0
        %519 = vmatpush1.msra.mxu0 0.0
        %520 = vmatprep.subr.mxu0 0.0
        %521 = vmatpush1.msra.mxu0 0.0
        %522 = vmatprep.mubr.f32.mxu0 0.0
        %523 = vmatmul.mubr.f32.gmra.mrb[0].mxu0 %v456
        %v524 = vpop.f32.mrb[0].mxu0
        %v525 = vadd.f32 %v452, %v524
        %v526 = vpop.f32.mrb[0].mxu0
        %v527 = vadd.f32 %v452, %v526
        %528 = vdwg.mxu0
        %v529 = vmax.f32 %v525, 0.0
        %v530 = vmax.f32 %v527, 0.0
        %531 = vrot.lane.b32.xlu0 %v529, 17
        %v532 = vpop.permute.xlu0 %531
        %533 = vrot.lane.b32.xlu0 %v530, 17
        %v534 = vpop.permute.xlu0 %533
        %v535 = vsel %vm276, %v532, %v534
        %v536 = vsel %vm276, %v534, %v532
        %v537 = vmul.f32 %v536, %v284
        %v538 = vmul.f32 %v535, %v288
        %539 = vrot.lane.b32.xlu0 %v529, 16
        %v540 = vpop.permute.xlu0 %539
        %541 = vrot.lane.b32.xlu0 %v530, 16
        %v542 = vpop.permute.xlu0 %541
        %v543 = vsel %vm297, %v540, %v542
        %v544 = vsel %vm297, %v542, %v540
        %v545 = vmul.f32 %v544, %v306
        %v546 = vmul.f32 %v543, %v310
        %547 = vrot.lane.b32.xlu0 %v529, 15
        %v548 = vpop.permute.xlu0 %547
        %549 = vrot.lane.b32.xlu0 %v530, 15
        %v550 = vpop.permute.xlu0 %549
        %v551 = vsel %vm319, %v548, %v550
        %v552 = vsel %vm319, %v550, %v548
        %v553 = vmul.f32 %v552, %v328
        %v554 = vmul.f32 %v551, %v332
        %555 = vrot.lane.b32.xlu0 %v529, 1
        %v556 = vpop.permute.xlu0 %555
        %557 = vrot.lane.b32.xlu0 %v530, 1
        %v558 = vpop.permute.xlu0 %557
        %v559 = vsel %vm341, %v556, %v558
        %v560 = vsel %vm341, %v558, %v556
        %v561 = vmul.f32 %v560, %v350
        %v562 = vmul.f32 %v559, %v354
        %563 = vrot.lane.b32.xlu0 %v529, 127
        %v564 = vpop.permute.xlu0 %563
        %565 = vrot.lane.b32.xlu0 %v530, 127
        %v566 = vpop.permute.xlu0 %565
        %v567 = vsel %vm363, %v564, %v566
        %v568 = vsel %vm363, %v566, %v564
        %v569 = vmul.f32 %v567, %v372
        %v570 = vmul.f32 %v568, %v376
        %571 = vrot.lane.b32.xlu0 %v529, 113
        %v572 = vpop.permute.xlu0 %571
        %573 = vrot.lane.b32.xlu0 %v530, 113
        %v574 = vpop.permute.xlu0 %573
        %v575 = vsel %vm385, %v572, %v574
        %v576 = vsel %vm385, %v574, %v572
        %v577 = vmul.f32 %v575, %v394
        %v578 = vmul.f32 %v576, %v398
        %579 = vrot.lane.b32.xlu0 %v529, 112
        %v580 = vpop.permute.xlu0 %579
        %581 = vrot.lane.b32.xlu0 %v530, 112
        %v582 = vpop.permute.xlu0 %581
        %v583 = vsel %vm407, %v580, %v582
        %v584 = vsel %vm407, %v582, %v580
        %v585 = vmul.f32 %v583, %v416
        %v586 = vmul.f32 %v584, %v420
        %587 = vrot.lane.b32.xlu0 %v529, 111
        %v588 = vpop.permute.xlu0 %587
        %589 = vrot.lane.b32.xlu0 %v530, 111
        %v590 = vpop.permute.xlu0 %589
        %v591 = vsel %vm429, %v588, %v590
        %v592 = vsel %vm429, %v590, %v588
        %v593 = vmul.f32 %v591, %v438
        %v594 = vmul.f32 %v592, %v442
        %v595 = vld [vmem:[%s4] sm:$0xff]
        %v596 = vld [vmem:[%s5] sm:$0xff]
        %598 = vset.pattern.permute.xlu0 0
        %599 = vperm.xlu0 %598, %v596
        %v600 = vpop.permute.xlu0 %599
        %v603 = vsel %vm454, %v595, 0
        %605 = vmatprep.subr.mxu0 %v538
        %606 = vmatpush1.msra.mxu0 %v537
        %607 = vmatprep.subr.mxu0 %v546
        %608 = vmatpush1.msra.mxu0 %v545
        %609 = vmatprep.subr.mxu0 %v554
        %610 = vmatpush1.msra.mxu0 %v553
        %611 = vmatprep.subr.mxu0 %v562
        %612 = vmatpush1.msra.mxu0 %v561
        %613 = vmatprep.subr.mxu0 %v530
        %614 = vmatpush1.msra.mxu0 %v529
        %615 = vmatprep.subr.mxu0 %v570
        %616 = vmatpush1.msra.mxu0 %v569
        %617 = vmatprep.subr.mxu0 %v578
        %618 = vmatpush1.msra.mxu0 %v577
        %619 = vmatprep.subr.mxu0 %v586
        %620 = vmatpush1.msra.mxu0 %v585
        %621 = vmatprep.subr.mxu0 %v594
        %622 = vmatpush1.msra.mxu0 %v593
        %623 = vmatprep.subr.mxu0 0.0
        %624 = vmatpush1.msra.mxu0 0.0
        %625 = vmatprep.subr.mxu0 0.0
        %626 = vmatpush1.msra.mxu0 0.0
        %627 = vmatprep.subr.mxu0 0.0
        %628 = vmatpush1.msra.mxu0 0.0
        %629 = vmatprep.subr.mxu0 0.0
        %630 = vmatpush1.msra.mxu0 0.0
        %631 = vmatprep.subr.mxu0 0.0
        %632 = vmatpush1.msra.mxu0 0.0
        %633 = vmatprep.subr.mxu0 0.0
        %634 = vmatpush1.msra.mxu0 0.0
        %635 = vmatprep.subr.mxu0 0.0
        %636 = vmatpush1.msra.mxu0 0.0
        %637 = vmatprep.subr.mxu0 0.0
        %638 = vmatpush1.msra.mxu0 0.0
        %639 = vmatprep.subr.mxu0 0.0
        %640 = vmatpush1.msra.mxu0 0.0
        %641 = vmatprep.subr.mxu0 0.0
        %642 = vmatpush1.msra.mxu0 0.0
        %643 = vmatprep.subr.mxu0 0.0
        %644 = vmatpush1.msra.mxu0 0.0
        %645 = vmatprep.subr.mxu0 0.0
        %646 = vmatpush1.msra.mxu0 0.0
        %647 = vmatprep.subr.mxu0 0.0
        %648 = vmatpush1.msra.mxu0 0.0
        %649 = vmatprep.subr.mxu0 0.0
        %650 = vmatpush1.msra.mxu0 0.0
        %651 = vmatprep.subr.mxu0 0.0
        %652 = vmatpush1.msra.mxu0 0.0
        %653 = vmatprep.subr.mxu0 0.0
        %654 = vmatpush1.msra.mxu0 0.0
        %655 = vmatprep.subr.mxu0 0.0
        %656 = vmatpush1.msra.mxu0 0.0
        %657 = vmatprep.subr.mxu0 0.0
        %658 = vmatpush1.msra.mxu0 0.0
        %659 = vmatprep.subr.mxu0 0.0
        %660 = vmatpush1.msra.mxu0 0.0
        %661 = vmatprep.subr.mxu0 0.0
        %662 = vmatpush1.msra.mxu0 0.0
        %663 = vmatprep.subr.mxu0 0.0
        %664 = vmatpush1.msra.mxu0 0.0
        %665 = vmatprep.subr.mxu0 0.0
        %666 = vmatpush1.msra.mxu0 0.0
        %667 = vmatprep.subr.mxu0 0.0
        %668 = vmatpush1.msra.mxu0 0.0
        %669 = vmatprep.mubr.f32.mxu0 0.0
        %670 = vmatmul.mubr.f32.gmra.mrb[0].mxu0 %v603
        %v671 = vpop.f32.mrb[0].mxu0
        %v672 = vadd.f32 %v600, %v671
        %v673 = vpop.f32.mrb[0].mxu0
        %v674 = vadd.f32 %v600, %v673
        %675 = vdwg.mxu0
        %v676 = vmax.f32 %v672, 0.0
        %v677 = vmax.f32 %v674, 0.0
        %678 = vst [vmem:[%s267] sm:$0xff] %v676
        %679 = vst [vmem:[%s267 + $0x8] sm:$0xff] %v677
        %s680 = sand.u32 %s162, 1
        %s681 = scalar_lea.sflag [#allocation4], %s680
        %s682 = sand.u32 %s162, 1
        %s683 = smul.addr %s682, 16
        %s684 = scalar_lea.vmem [#allocation5], %s683
        // Predicated region
        $region49: #{tpu_custom_call.1} parent=43 // pred_check
          %p685 = pneg %p172
        $region50: #{tpu_custom_call.1} parent=43 // pred_check_branch
          %687 = sbr.rel (%p685) target = $region52
        $region51: #{tpu_custom_call.1} parent=43 // pred_region
          %s689 = ssub.s32 256, 256
          %690 = vsyncadd %s681, %s689
          %s691 = smul.addr %s23, 2
          %s692 = smul.addr %s691, 128
          %s693 = scalar_lea.hbm %s6, %s692
          %s695 = sshll.u32 %s684, 4
          %s696 = int_to_ptr.vmem [resolvable:$true] %s695
          %698 = dma.vmem_to_hbm [thread:$0]  %s696, 256, %s693, %s681
        $region52: #{tpu_custom_call.1} parent=43 // pred_fallthru
          _
      $region44: #{tpu_custom_call.1} parent=5 // pred_fallthru
        _
      %p699 = scmp.le.s32.totalorder 2, %s18
      // Predicated region
      $region53: #{tpu_custom_call.1} parent=5 // pred_check
        %p700 = pneg %p699
      $region54: #{tpu_custom_call.1} parent=5 // pred_check_branch
        %702 = sbr.rel (%p700) target = $region56
      $region55: #{tpu_custom_call.1} parent=5 // pred_region
        %s703 = ssub.s32 %s18, 2
        // Predicated region
        $region57: #{tpu_custom_call.1} parent=55 // pred_check
          %p704 = pneg %p178
        $region58: #{tpu_custom_call.1} parent=55 // pred_check_branch
          %706 = sbr.rel (%p704) target = $region60
        $region59: #{tpu_custom_call.1} parent=55 // pred_region
          %s707 = sand.u32 %s163, 1
          %s708 = scalar_lea.sflag [#allocation4], %s707
          %s709 = sand.u32 %s163, 1
          %s710 = smul.addr %s709, 16
          %s711 = scalar_lea.vmem [#allocation5], %s710
          %712 = dma.done %s708, 256
        $region60: #{tpu_custom_call.1} parent=55 // pred_fallthru
          _
      $region56: #{tpu_custom_call.1} parent=5 // pred_fallthru
        _
    $region6: #{tpu_custom_call.1} parent=1 // loop_footer
      %s22 = sadd.s32 1, %s18
    $region7: #{tpu_custom_call.1} parent=1 // loop_footer_branch
      %17 = sbr.rel target = $region3
    $region8: #{tpu_custom_call.1} parent=1 // loop_exit
      _
    %713 = vsyncpa [#allocation3], 1
    %s714 = scalar_lea.sflag [#allocation3], 1
    %715 = vsyncpa %s714, 1
    %716 = vsyncpa [#allocation4], 1
    %s717 = scalar_lea.sflag [#allocation4], 1
    %718 = vsyncpa %s717, 1

</llo_original>
